<compile_context>
chip_gen: v7x
topology: tpu7x:2x2x1
jax: 0.10.0
libtpu: 0.0.40
codegen_flags: <defaults>
</compile_context>

<pallas_src>
import jax
import jax.numpy as jnp
from jax.experimental import pallas as pl
from jax.experimental.pallas import tpu as pltpu


def _pair_classifier_kernel(s1_ref, s2_ref, m1_ref, m2_ref,
                            w1a_ref, w1b_ref, w1c_ref, w1d_ref,
                            b1_ref, w2_ref, b2_ref, out_ref):
    """Fused masked-mean-pool + [e1, e2, |e1-e2|, e1*e2] MLP head for one batch tile."""

    def masked_mean_pool(s_ref, m_ref):
        s = s_ref[...]                                # (TB, T, H), native dtype
        m = m_ref[...]                                # (TB, T),   native dtype (exact 0/1)
        # Product stays in the native dtype (no f32 up-cast of the whole tile for
        # bf16 inputs); accumulation over T happens in f32 via the reduce dtype.
        num = jnp.sum(s * m[:, :, None], axis=1, dtype=jnp.float32)           # (TB, H)
        den = jnp.maximum(jnp.sum(m.astype(jnp.float32), axis=1, keepdims=True), 1.0)
        # Exact divide: den is only (TB, 1) in a memory-bound kernel, and this
        # keeps numerics identical to the PyTorch module (review correctness note).
        return num / den

    e1 = masked_mean_pool(s1_ref, m1_ref)             # (TB, H) f32
    e2 = masked_mean_pool(s2_ref, m2_ref)             # (TB, H) f32
    d = jnp.abs(e1 - e2)
    p = e1 * e2

    # pair_emb = [e1, e2, |e1-e2|, e1*e2] @ W1 == sum of four (H, D) matmuls.
    # W1 is pre-split in the wrapper, so every operand is a whole VMEM block:
    # no lane-axis concat and no per-step relayout copies even for unaligned H.
    h = (jnp.dot(e1, w1a_ref[...], preferred_element_type=jnp.float32)
         + jnp.dot(e2, w1b_ref[...], preferred_element_type=jnp.float32)
         + jnp.dot(d, w1c_ref[...], preferred_element_type=jnp.float32)
         + jnp.dot(p, w1d_ref[...], preferred_element_type=jnp.float32)
         + b1_ref[...])
    h = jnp.tanh(h)                                    # (TB, D)

    out_ref[...] = (jnp.dot(h, w2_ref[...], preferred_element_type=jnp.float32)
                    + b2_ref[...]).astype(out_ref.dtype)          # (TB, C)


def _vmem_capacity_bytes():
    """Per-TensorCore VMEM capacity; falls back to the v7x 64 MiB floor."""
    try:
        return int(pltpu.get_tpu_info().vmem_capacity_bytes)
    except Exception:
        return 64 * 1024 * 1024


def _bytes_per_batch_row(T, H, C, seq_itemsize, mask_itemsize):
    """VMEM bytes per batch row, including in-kernel pooling temporaries."""
    seq = 2 * (2 * T * H * seq_itemsize      # s1 + s2: double-buffered input tiles
               + T * H * seq_itemsize        # masked product temporary (native dtype)
               + T * H * 4)                  # f32 up-cast feeding the f32-accum reduce
    masks = 2 * 2 * T * mask_itemsize        # two masks, double-buffered
    out = 2 * C * 4                          # output tile, double-buffered
    return seq + masks + out


def pair_classifier(s1, s2, mask1, mask2, params, *,
                    vmem_fraction=0.8,
                    single_buffer_weights=None,
                    core_parallel=False):
    """Mirrors PairClassifier.forward with attn=None and idx1=idx2=[].

    s1, s2: (B, T, H) hidden states (any float dtype; bf16 recommended for HBM traffic).
    mask1, mask2: (B, T) or (B, T, 1) binary non-pad masks.
    params: w1 (4H, D), b1 (D,)/(1, D), w2 (D, C), b2 (C,)/(1, C).
    core_parallel: set True on v7x if profiling shows the batch grid is not being
      sharded across the two TensorCores by plain "parallel".
    """
    # TODO(synk): idx1/idx2 token-gather path and the optional attn module are not implemented.
    if mask1.ndim > 2:
        mask1 = jnp.squeeze(mask1, axis=-1)
    if mask2.ndim > 2:
        mask2 = jnp.squeeze(mask2, axis=-1)
    # Masks are 0/1 -> exact in the sequence dtype; keeping them in that dtype
    # avoids promoting the (TB, T, H) product to f32 for bf16 inputs.
    mask1 = mask1.astype(s1.dtype)
    mask2 = mask2.astype(s2.dtype)

    B, T, H = s1.shape
    w1 = params["w1"]
    b1 = jnp.reshape(params["b1"], (1, -1))
    w2 = params["w2"]
    b2 = jnp.reshape(params["b2"], (1, -1))
    D = w1.shape[1]
    C = w2.shape[1]
    assert w1.shape[0] == 4 * H, "w1 must have 4*H input features"

    # Pre-split W1 so each in-kernel matmul operand is a whole block (free view)
    # regardless of whether H is a multiple of the (8, 128) tiling.
    w1a, w1b, w1c, w1d = w1[0:H], w1[H:2 * H], w1[2 * H:3 * H], w1[3 * H:4 * H]

    weights = (w1a, w1b, w1c, w1d, b1, w2, b2)
    weight_bytes = sum(int(w.size) * jnp.dtype(w.dtype).itemsize for w in weights)
    if single_buffer_weights is None:
        # Only drop the (never used) second weight buffer when the resident copy
        # is big enough to matter for the tiling budget (large H*D classifiers).
        single_buffer_weights = weight_bytes > (1 << 20)
    weight_bufs = 1 if single_buffer_weights else 2
    resident_weight_bytes = weight_bufs * weight_bytes

    # Generation-aware VMEM budget (v5e/v6e: 128 MiB, v7x: 64 MiB per TC).
    vmem_cap = _vmem_capacity_bytes()
    vmem_limit_bytes = int(vmem_cap * vmem_fraction)
    tile_budget = max(vmem_limit_bytes - resident_weight_bytes - (2 << 20), 1)

    per_row = _bytes_per_batch_row(
        T, H, C, jnp.dtype(s1.dtype).itemsize, jnp.dtype(mask1.dtype).itemsize)
    tb = tile_budget // per_row
    if tb >= B:
        TB = B                                # full-extent block: always layout-legal
    else:
        TB = max(8, (int(tb) // 8) * 8)       # sublane-aligned partial tile
    grid = (pl.cdiv(B, TB),)
    # NOTE: if B % TB != 0 the last tile reads padded rows. Rows are fully
    # independent and the padded output rows are never read back, so this is safe;
    # do not introduce cross-row reductions without revisiting this.

    def _weight_spec(shape):
        ndim = len(shape)
        index_map = lambda b: (0,) * ndim      # constant -> DMA'd once, resident
        if single_buffer_weights:
            return pl.BlockSpec(shape, index_map, pipeline_mode=pl.Buffered(1))
        return pl.BlockSpec(shape, index_map)

    batch_sem = pltpu.CORE_PARALLEL if core_parallel else "parallel"

    return pl.pallas_call(
        _pair_classifier_kernel,
        out_shape=jax.ShapeDtypeStruct((B, C), jnp.float32),
        grid_spec=pltpu.PrefetchScalarGridSpec(
            num_scalar_prefetch=0,
            grid=grid,
            in_specs=[
                # Per-grid-step batch tiles (auto double-buffered pipeline).
                pl.BlockSpec((TB, T, H), lambda b: (b, 0, 0)),   # s1
                pl.BlockSpec((TB, T, H), lambda b: (b, 0, 0)),   # s2
                pl.BlockSpec((TB, T), lambda b: (b, 0)),         # mask1
                pl.BlockSpec((TB, T), lambda b: (b, 0)),         # mask2
                # Resident classifier parameters.
                _weight_spec((H, D)),                            # w1[0H:1H]
                _weight_spec((H, D)),                            # w1[1H:2H]
                _weight_spec((H, D)),                            # w1[2H:3H]
                _weight_spec((H, D)),                            # w1[3H:4H]
                _weight_spec((1, D)),                            # b1
                _weight_spec((D, C)),                            # w2
                _weight_spec((1, C)),                            # b2
            ],
            out_specs=pl.BlockSpec((TB, C), lambda b: (b, 0)),
        ),
        compiler_params=pltpu.CompilerParams(
            dimension_semantics=(batch_sem,),
            vmem_limit_bytes=vmem_limit_bytes,
        ),
    )(s1, s2, mask1, mask2, w1a, w1b, w1c, w1d, b1, w2, b2)


def _reference(s1, s2, mask1, mask2, params):
    """Pure-JAX reference (f32 compute) for the sanity check."""
    def pool(s, m):
        w = m.astype(jnp.float32)[:, :, None]
        return jnp.sum(s.astype(jnp.float32) * w, axis=1) / jnp.maximum(
            jnp.sum(m.astype(jnp.float32), axis=1, keepdims=True), 1.0)
    e1, e2 = pool(s1, mask1), pool(s2, mask2)
    pair = jnp.concatenate([e1, e2, jnp.abs(e1 - e2), e1 * e2], axis=-1)
    h = jnp.tanh(pair @ params["w1"] + jnp.reshape(params["b1"], (1, -1)))
    return h @ params["w2"] + jnp.reshape(params["b2"], (1, -1))


if __name__ == "__main__":
    B, T, H = 2, 8, 32          # batch, seq, hidden
    D_CLS, N_CLASSES = 32, 2    # classifier hidden dim, number of classes

    key = jax.random.PRNGKey(0)
    k_s1, k_s2, k_w1, k_b1, k_w2, k_b2 = jax.random.split(key, 6)

    s1 = jax.random.normal(k_s1, (B, T, H), dtype=jnp.float32)
    s2 = jax.random.normal(k_s2, (B, T, H), dtype=jnp.float32)

    # binary non-pad masks (trailing singleton dim exercises the squeeze path)
    lens1 = jnp.array([6, 8], dtype=jnp.int32)
    lens2 = jnp.array([8, 5], dtype=jnp.int32)
    pos = jnp.arange(T)[None, :]
    mask1 = (pos < lens1[:, None]).astype(jnp.float32)[:, :, None]  # (B, T, 1)
    mask2 = (pos < lens2[:, None]).astype(jnp.float32)[:, :, None]  # (B, T, 1)

    # classifier parameters: Linear(4H, D) -> tanh -> Linear(D, C)
    params = {
        "w1": jax.random.normal(k_w1, (4 * H, D_CLS), dtype=jnp.float32) * 0.05,
        "b1": jax.random.normal(k_b1, (1, D_CLS), dtype=jnp.float32) * 0.01,
        "w2": jax.random.normal(k_w2, (D_CLS, N_CLASSES), dtype=jnp.float32) * 0.05,
        "b2": jax.random.normal(k_b2, (1, N_CLASSES), dtype=jnp.float32) * 0.01,
    }

    # f32 path (matches the torch module's default dtype).
    logits = pair_classifier(s1, s2, mask1, mask2, params)
    jax.block_until_ready(logits)

    ref = _reference(s1, s2, jnp.squeeze(mask1, -1), jnp.squeeze(mask2, -1), params)
    assert logits.shape == (B, N_CLASSES)
    # Exact divide in the kernel -> tight tolerance (only matmul-order differences remain).
    assert jnp.allclose(logits, ref, atol=2e-4, rtol=1e-3), (
        f"max abs err {jnp.max(jnp.abs(logits - ref))}")

    # bf16 pass-through smoke test: native dtype through HBM, f32 accumulation in-kernel.
    s1_bf, s2_bf = s1.astype(jnp.bfloat16), s2.astype(jnp.bfloat16)
    logits_bf = pair_classifier(s1_bf, s2_bf, mask1, mask2, params)
    jax.block_until_ready(logits_bf)
    ref_bf = _reference(s1_bf, s2_bf, jnp.squeeze(mask1, -1), jnp.squeeze(mask2, -1), params)
    assert jnp.allclose(logits_bf, ref_bf, atol=2e-2, rtol=5e-2)

    print("KERNEL_OK")
</pallas_src>

<mosaic_0001>
module attributes {stable_mosaic.version = 11 : i64} {
  func.func @_pair_classifier_kernel(%arg0: i32, %arg1: memref<2x8x32xf32, #tpu.memory_space<vmem>>, %arg2: memref<2x8x32xf32, #tpu.memory_space<vmem>>, %arg3: memref<2x8xf32, #tpu.memory_space<vmem>>, %arg4: memref<2x8xf32, #tpu.memory_space<vmem>>, %arg5: memref<32x32xf32, #tpu.memory_space<vmem>>, %arg6: memref<32x32xf32, #tpu.memory_space<vmem>>, %arg7: memref<32x32xf32, #tpu.memory_space<vmem>>, %arg8: memref<32x32xf32, #tpu.memory_space<vmem>>, %arg9: memref<1x32xf32, #tpu.memory_space<vmem>>, %arg10: memref<32x2xf32, #tpu.memory_space<vmem>>, %arg11: memref<1x2xf32, #tpu.memory_space<vmem>>, %arg12: memref<2x2xf32, #tpu.memory_space<vmem>>) attributes {dimension_semantics = [#tpu.dimension_semantics<parallel>], iteration_bounds = array<i64: 1>, scalar_prefetch = 0 : i64, scratch_operands = 0 : i64, tpu.core_type = #tpu.core_type<tc>, window_params = [{transform_indices = @transform_0, window_bounds = array<i64: 2, 8, 32>}, {transform_indices = @transform_1, window_bounds = array<i64: 2, 8, 32>}, {transform_indices = @transform_2, window_bounds = array<i64: 2, 8>}, {transform_indices = @transform_3, window_bounds = array<i64: 2, 8>}, {pipeline_mode = #tpu.pipeline_mode<synchronous>, transform_indices = @transform_4, window_bounds = array<i64: 32, 32>}, {pipeline_mode = #tpu.pipeline_mode<synchronous>, transform_indices = @transform_5, window_bounds = array<i64: 32, 32>}, {pipeline_mode = #tpu.pipeline_mode<synchronous>, transform_indices = @transform_6, window_bounds = array<i64: 32, 32>}, {pipeline_mode = #tpu.pipeline_mode<synchronous>, transform_indices = @transform_7, window_bounds = array<i64: 32, 32>}, {pipeline_mode = #tpu.pipeline_mode<synchronous>, transform_indices = @transform_8, window_bounds = array<i64: 1, 32>}, {pipeline_mode = #tpu.pipeline_mode<synchronous>, transform_indices = @transform_9, window_bounds = array<i64: 32, 2>}, {pipeline_mode = #tpu.pipeline_mode<synchronous>, transform_indices = @transform_10, window_bounds = array<i64: 1, 2>}, {transform_indices = @transform_11, window_bounds = array<i64: 2, 2>}]} {
    %c0 = arith.constant 0 : index
    %c0_0 = arith.constant 0 : index
    %c0_1 = arith.constant 0 : index
    %0 = vector.load %arg1[%c0, %c0_0, %c0_1] : memref<2x8x32xf32, #tpu.memory_space<vmem>>, vector<2x8x32xf32>
    %c0_2 = arith.constant 0 : index
    %c0_3 = arith.constant 0 : index
    %1 = vector.load %arg3[%c0_2, %c0_3] : memref<2x8xf32, #tpu.memory_space<vmem>>, vector<2x8xf32>
    %2 = vector.shape_cast %1 : vector<2x8xf32> to vector<2x8x1xf32>
    %3 = vector.broadcast %2 : vector<2x8x1xf32> to vector<2x8x32xf32>
    %4 = arith.mulf %0, %3 : vector<2x8x32xf32>
    %cst = arith.constant dense<0.000000e+00> : vector<2x32xf32>
    %5 = vector.multi_reduction <add>, %4, %cst [1] : vector<2x8x32xf32> to vector<2x32xf32>
    %cst_4 = arith.constant dense<0.000000e+00> : vector<2xf32>
    %6 = vector.multi_reduction <add>, %1, %cst_4 [1] : vector<2x8xf32> to vector<2xf32>
    %7 = vector.shape_cast %6 : vector<2xf32> to vector<2x1xf32>
    %cst_5 = arith.constant 1.000000e+00 : f32
    %8 = vector.broadcast %cst_5 : f32 to vector<2x1xf32>
    %9 = arith.maximumf %7, %8 : vector<2x1xf32>
    %10 = vector.broadcast %9 : vector<2x1xf32> to vector<2x32xf32>
    %11 = arith.divf %5, %10 : vector<2x32xf32>
    %c0_6 = arith.constant 0 : index
    %c0_7 = arith.constant 0 : index
    %c0_8 = arith.constant 0 : index
    %12 = vector.load %arg2[%c0_6, %c0_7, %c0_8] : memref<2x8x32xf32, #tpu.memory_space<vmem>>, vector<2x8x32xf32>
    %c0_9 = arith.constant 0 : index
    %c0_10 = arith.constant 0 : index
    %13 = vector.load %arg4[%c0_9, %c0_10] : memref<2x8xf32, #tpu.memory_space<vmem>>, vector<2x8xf32>
    %14 = vector.shape_cast %13 : vector<2x8xf32> to vector<2x8x1xf32>
    %15 = vector.broadcast %14 : vector<2x8x1xf32> to vector<2x8x32xf32>
    %16 = arith.mulf %12, %15 : vector<2x8x32xf32>
    %cst_11 = arith.constant dense<0.000000e+00> : vector<2x32xf32>
    %17 = vector.multi_reduction <add>, %16, %cst_11 [1] : vector<2x8x32xf32> to vector<2x32xf32>
    %cst_12 = arith.constant dense<0.000000e+00> : vector<2xf32>
    %18 = vector.multi_reduction <add>, %13, %cst_12 [1] : vector<2x8xf32> to vector<2xf32>
    %19 = vector.shape_cast %18 : vector<2xf32> to vector<2x1xf32>
    %cst_13 = arith.constant 1.000000e+00 : f32
    %20 = vector.broadcast %cst_13 : f32 to vector<2x1xf32>
    %21 = arith.maximumf %19, %20 : vector<2x1xf32>
    %22 = vector.broadcast %21 : vector<2x1xf32> to vector<2x32xf32>
    %23 = arith.divf %17, %22 : vector<2x32xf32>
    %24 = arith.subf %11, %23 : vector<2x32xf32>
    %25 = math.absf %24 : vector<2x32xf32>
    %26 = arith.mulf %11, %23 : vector<2x32xf32>
    %c0_14 = arith.constant 0 : index
    %c0_15 = arith.constant 0 : index
    %27 = vector.load %arg5[%c0_14, %c0_15] : memref<32x32xf32, #tpu.memory_space<vmem>>, vector<32x32xf32>
    %cst_16 = arith.constant dense<0.000000e+00> : vector<2x32xf32>
    %28 = tpu.matmul %11, %27, %cst_16 {dimension_numbers = #tpu.dot_dimension_numbers<[1], [0], [0], [1], [0, 0, 1, 1], [], []>} : vector<2x32xf32>, vector<32x32xf32>, vector<2x32xf32> -> vector<2x32xf32>
    %c0_17 = arith.constant 0 : index
    %c0_18 = arith.constant 0 : index
    %29 = vector.load %arg6[%c0_17, %c0_18] : memref<32x32xf32, #tpu.memory_space<vmem>>, vector<32x32xf32>
    %cst_19 = arith.constant dense<0.000000e+00> : vector<2x32xf32>
    %30 = tpu.matmul %23, %29, %cst_19 {dimension_numbers = #tpu.dot_dimension_numbers<[1], [0], [0], [1], [0, 0, 1, 1], [], []>} : vector<2x32xf32>, vector<32x32xf32>, vector<2x32xf32> -> vector<2x32xf32>
    %31 = arith.addf %28, %30 : vector<2x32xf32>
    %c0_20 = arith.constant 0 : index
    %c0_21 = arith.constant 0 : index
    %32 = vector.load %arg7[%c0_20, %c0_21] : memref<32x32xf32, #tpu.memory_space<vmem>>, vector<32x32xf32>
    %cst_22 = arith.constant dense<0.000000e+00> : vector<2x32xf32>
    %33 = tpu.matmul %25, %32, %cst_22 {dimension_numbers = #tpu.dot_dimension_numbers<[1], [0], [0], [1], [0, 0, 1, 1], [], []>} : vector<2x32xf32>, vector<32x32xf32>, vector<2x32xf32> -> vector<2x32xf32>
    %34 = arith.addf %31, %33 : vector<2x32xf32>
    %c0_23 = arith.constant 0 : index
    %c0_24 = arith.constant 0 : index
    %35 = vector.load %arg8[%c0_23, %c0_24] : memref<32x32xf32, #tpu.memory_space<vmem>>, vector<32x32xf32>
    %cst_25 = arith.constant dense<0.000000e+00> : vector<2x32xf32>
    %36 = tpu.matmul %26, %35, %cst_25 {dimension_numbers = #tpu.dot_dimension_numbers<[1], [0], [0], [1], [0, 0, 1, 1], [], []>} : vector<2x32xf32>, vector<32x32xf32>, vector<2x32xf32> -> vector<2x32xf32>
    %37 = arith.addf %34, %36 : vector<2x32xf32>
    %c0_26 = arith.constant 0 : index
    %c0_27 = arith.constant 0 : index
    %38 = vector.load %arg9[%c0_26, %c0_27] : memref<1x32xf32, #tpu.memory_space<vmem>>, vector<1x32xf32>
    %39 = vector.broadcast %38 : vector<1x32xf32> to vector<2x32xf32>
    %40 = arith.addf %37, %39 : vector<2x32xf32>
    %41 = math.tanh %40 : vector<2x32xf32>
    %c0_28 = arith.constant 0 : index
    %c0_29 = arith.constant 0 : index
    %42 = vector.load %arg10[%c0_28, %c0_29] : memref<32x2xf32, #tpu.memory_space<vmem>>, vector<32x2xf32>
    %cst_30 = arith.constant dense<0.000000e+00> : vector<2x2xf32>
    %43 = tpu.matmul %41, %42, %cst_30 {dimension_numbers = #tpu.dot_dimension_numbers<[1], [0], [0], [1], [0, 0, 1, 1], [], []>} : vector<2x32xf32>, vector<32x2xf32>, vector<2x2xf32> -> vector<2x2xf32>
    %c0_31 = arith.constant 0 : index
    %c0_32 = arith.constant 0 : index
    %44 = vector.load %arg11[%c0_31, %c0_32] : memref<1x2xf32, #tpu.memory_space<vmem>>, vector<1x2xf32>
    %45 = vector.broadcast %44 : vector<1x2xf32> to vector<2x2xf32>
    %46 = arith.addf %43, %45 : vector<2x2xf32>
    %c0_33 = arith.constant 0 : index
    %c0_34 = arith.constant 0 : index
    %47 = vector.load %arg12[%c0_33, %c0_34] : memref<2x2xf32, #tpu.memory_space<vmem>>, vector<2x2xf32>
    tpu.vector_store %arg12[%c0_33, %c0_34], %46 {strides = array<i32>} : memref<2x2xf32, #tpu.memory_space<vmem>>, vector<2x2xf32>,
    return
  }
  func.func @transform_0(%arg0: i32) -> (i32, i32, i32) {
    %c0_i32 = arith.constant 0 : i32
    %c0_i32_0 = arith.constant 0 : i32
    %c0_i32_1 = arith.constant 0 : i32
    return %arg0, %c0_i32, %c0_i32_0 : i32, i32, i32
  }
  func.func @transform_1(%arg0: i32) -> (i32, i32, i32) {
    %c0_i32 = arith.constant 0 : i32
    %c0_i32_0 = arith.constant 0 : i32
    %c0_i32_1 = arith.constant 0 : i32
    return %arg0, %c0_i32, %c0_i32_0 : i32, i32, i32
  }
  func.func @transform_2(%arg0: i32) -> (i32, i32) {
    %c0_i32 = arith.constant 0 : i32
    %c0_i32_0 = arith.constant 0 : i32
    return %arg0, %c0_i32 : i32, i32
  }
  func.func @transform_3(%arg0: i32) -> (i32, i32) {
    %c0_i32 = arith.constant 0 : i32
    %c0_i32_0 = arith.constant 0 : i32
    return %arg0, %c0_i32 : i32, i32
  }
  func.func @transform_4(%arg0: i32) -> (i32, i32) {
    %c0_i32 = arith.constant 0 : i32
    %c0_i32_0 = arith.constant 0 : i32
    %c0_i32_1 = arith.constant 0 : i32
    return %c0_i32, %c0_i32_0 : i32, i32
  }
  func.func @transform_5(%arg0: i32) -> (i32, i32) {
    %c0_i32 = arith.constant 0 : i32
    %c0_i32_0 = arith.constant 0 : i32
    %c0_i32_1 = arith.constant 0 : i32
    return %c0_i32, %c0_i32_0 : i32, i32
  }
  func.func @transform_6(%arg0: i32) -> (i32, i32) {
    %c0_i32 = arith.constant 0 : i32
    %c0_i32_0 = arith.constant 0 : i32
    %c0_i32_1 = arith.constant 0 : i32
    return %c0_i32, %c0_i32_0 : i32, i32
  }
  func.func @transform_7(%arg0: i32) -> (i32, i32) {
    %c0_i32 = arith.constant 0 : i32
    %c0_i32_0 = arith.constant 0 : i32
    %c0_i32_1 = arith.constant 0 : i32
    return %c0_i32, %c0_i32_0 : i32, i32
  }
  func.func @transform_8(%arg0: i32) -> (i32, i32) {
    %c0_i32 = arith.constant 0 : i32
    %c0_i32_0 = arith.constant 0 : i32
    %c0_i32_1 = arith.constant 0 : i32
    return %c0_i32, %c0_i32_0 : i32, i32
  }
  func.func @transform_9(%arg0: i32) -> (i32, i32) {
    %c0_i32 = arith.constant 0 : i32
    %c0_i32_0 = arith.constant 0 : i32
    %c0_i32_1 = arith.constant 0 : i32
    return %c0_i32, %c0_i32_0 : i32, i32
  }
  func.func @transform_10(%arg0: i32) -> (i32, i32) {
    %c0_i32 = arith.constant 0 : i32
    %c0_i32_0 = arith.constant 0 : i32
    %c0_i32_1 = arith.constant 0 : i32
    return %c0_i32, %c0_i32_0 : i32, i32
  }
  func.func @transform_11(%arg0: i32) -> (i32, i32) {
    %c0_i32 = arith.constant 0 : i32
    %c0_i32_0 = arith.constant 0 : i32
    return %arg0, %c0_i32 : i32, i32
  }
}

</mosaic_0001>

<llo_original>
// kernel: tpu_custom_call.1
$region0: #{tpu_custom_call.1}
  #allocation0 [shape = 'u32[]', space=smem, size = 0x4, offset = 0x4, fixed_abs, tag = 'smem constant byte address 0x4 - core index']
  #allocation1 [shape = 'u32[144,128]{1,0:T(1,128)}', space=vmem, size = 0x12000, scoped, tag = 'internal scratch']
  %s0 = inlined_call_operand.vmem [shape: f32[2,8,32], index: 0, kind: input, shape index: {}]
  %s1 = inlined_call_operand.hbm [shape: f32[2,8,32], index: 1, kind: input, shape index: {}]
  %s2 = inlined_call_operand.hbm [shape: f32[2,8], index: 2, kind: input, shape index: {}]
  %s3 = inlined_call_operand.hbm [shape: f32[2,8], index: 3, kind: input, shape index: {}]
  %s4 = inlined_call_operand.vmem [shape: f32[32,32], index: 4, kind: input, shape index: {}]
  %s5 = inlined_call_operand.hbm [shape: f32[32,32], index: 5, kind: input, shape index: {}]
  %s6 = inlined_call_operand.hbm [shape: f32[32,32], index: 6, kind: input, shape index: {}]
  %s7 = inlined_call_operand.hbm [shape: f32[32,32], index: 7, kind: input, shape index: {}]
  %s8 = inlined_call_operand.vmem [shape: f32[1,32], index: 8, kind: input, shape index: {}]
  %s9 = inlined_call_operand.vmem [shape: f32[32,2], index: 9, kind: input, shape index: {}]
  %s10 = inlined_call_operand.vmem [shape: f32[1,2], index: 10, kind: input, shape index: {}]
  %s11 = inlined_call_operand.hbm [shape: f32[2,2], index: 11, kind: output, shape index: {}]
  %s12 = sld [smem:[#allocation0]]
  $region78: #{tpu_custom_call.1} parent=0
    _
  %s14 = ssub.s32 1, %s12
  %s15 = scalar_select 0, %s14, %s12
  $region1: #{tpu_custom_call.1} parent=0
    #allocation2 [shape = 'u8[8192]{0}', space=vmem, size = 0x2000, scoped, tag = 'input window, operand 1, single buffered']
    #allocation3 [shape = 's32[1]{0}', space=sflag, size = 0x4, scoped, tag = 'scoped memory for tpu_custom_call.1']
    #allocation4 [shape = 's32[1]{0}', space=sflag, size = 0x4, scoped, tag = 'scoped memory for tpu_custom_call.1']
    #allocation5 [shape = 'u8[1024]{0}', space=vmem, size = 0x400, scoped, tag = 'input window, operand 2, single buffered']
    #allocation6 [shape = 's32[1]{0}', space=sflag, size = 0x4, scoped, tag = 'scoped memory for tpu_custom_call.1']
    #allocation7 [shape = 'u8[1024]{0}', space=vmem, size = 0x400, scoped, tag = 'input window, operand 3, single buffered']
    #allocation8 [shape = 'u8[16384]{0}', space=vmem, size = 0x4000, scoped, tag = 'input window, operand 5, single buffered']
    #allocation9 [shape = 's32[1]{0}', space=sflag, size = 0x4, scoped, tag = 'scoped memory for tpu_custom_call.1']
    #allocation10 [shape = 'u8[16384]{0}', space=vmem, size = 0x4000, scoped, tag = 'input window, operand 6, single buffered']
    #allocation11 [shape = 'u8[16384]{0}', space=vmem, size = 0x4000, scoped, tag = 'input window, operand 7, single buffered']
    #allocation12 [shape = 's32[1]{0}', space=sflag, size = 0x4, scoped, tag = 'scoped memory for tpu_custom_call.1']
    #allocation13 [shape = 'u8[1024]{0}', space=vmem, size = 0x400, scoped, tag = 'output window, operand 0, single buffered']
    %16 = vsyncpa [#allocation3], 0
    %17 = vsyncpa [#allocation6], 0
    %18 = vsyncpa [#allocation9], 0
    %19 = vsyncpa [#allocation12], 0
    %20 = vsyncpa [#allocation4], 0
    // Predicated region
    $region2: #{tpu_custom_call.1} parent=1 // pred_check
      _
    $region3: #{tpu_custom_call.1} parent=1 // pred_check_branch
      %22 = sbr.rel (0) target = $region5
    $region4: #{tpu_custom_call.1} parent=1 // pred_region
      _
    $region5: #{tpu_custom_call.1} parent=1 // pred_fallthru
      _
    // Predicated region
    $region6: #{tpu_custom_call.1} parent=1 // pred_check
      _
    $region7: #{tpu_custom_call.1} parent=1 // pred_check_branch
      %24 = sbr.rel (0) target = $region9
    $region8: #{tpu_custom_call.1} parent=1 // pred_region
      %s26 = ssub.s32 256, 256
      %27 = vsyncadd [#allocation3], %s26
      %s28 = sshll.u32 [#allocation2], 4
      %s29 = int_to_ptr.vmem [resolvable:$true] %s28
      %34 = dma.hbm_to_vmem [thread:$0]  %s1, 256, %s29, [#allocation3], 128, 128, 8
    $region9: #{tpu_custom_call.1} parent=1 // pred_fallthru
      _
    // Predicated region
    $region10: #{tpu_custom_call.1} parent=1 // pred_check
      _
    $region11: #{tpu_custom_call.1} parent=1 // pred_check_branch
      %36 = sbr.rel (0) target = $region13
    $region12: #{tpu_custom_call.1} parent=1 // pred_region
      %s38 = ssub.s32 32, 32
      %39 = vsyncadd [#allocation6], %s38
      %s41 = sshll.u32 [#allocation5], 4
      %s42 = int_to_ptr.vmem [resolvable:$true] %s41
      %44 = dma.hbm_to_vmem [thread:$0]  %s2, 32, %s42, [#allocation6]
    $region13: #{tpu_custom_call.1} parent=1 // pred_fallthru
      _
    // Predicated region
    $region14: #{tpu_custom_call.1} parent=1 // pred_check
      _
    $region15: #{tpu_custom_call.1} parent=1 // pred_check_branch
      %46 = sbr.rel (0) target = $region17
    $region16: #{tpu_custom_call.1} parent=1 // pred_region
      %s48 = ssub.s32 32, 32
      %49 = vsyncadd [#allocation6], %s48
      %s51 = sshll.u32 [#allocation7], 4
      %s52 = int_to_ptr.vmem [resolvable:$true] %s51
      %54 = dma.hbm_to_vmem [thread:$0]  %s3, 32, %s52, [#allocation6]
    $region17: #{tpu_custom_call.1} parent=1 // pred_fallthru
      _
    // Predicated region
    $region18: #{tpu_custom_call.1} parent=1 // pred_check
      _
    $region19: #{tpu_custom_call.1} parent=1 // pred_check_branch
      %56 = sbr.rel (0) target = $region21
    $region20: #{tpu_custom_call.1} parent=1 // pred_region
      _
    $region21: #{tpu_custom_call.1} parent=1 // pred_fallthru
      _
    // Predicated region
    $region22: #{tpu_custom_call.1} parent=1 // pred_check
      _
    $region23: #{tpu_custom_call.1} parent=1 // pred_check_branch
      %58 = sbr.rel (0) target = $region25
    $region24: #{tpu_custom_call.1} parent=1 // pred_region
      %s60 = ssub.s32 512, 512
      %61 = vsyncadd [#allocation9], %s60
      %s62 = sshll.u32 [#allocation8], 4
      %s63 = int_to_ptr.vmem [resolvable:$true] %s62
      %68 = dma.hbm_to_vmem [thread:$0]  %s5, 512, %s63, [#allocation9], 128, 128, 8
    $region25: #{tpu_custom_call.1} parent=1 // pred_fallthru
      _
    // Predicated region
    $region26: #{tpu_custom_call.1} parent=1 // pred_check
      _
    $region27: #{tpu_custom_call.1} parent=1 // pred_check_branch
      %70 = sbr.rel (0) target = $region29
    $region28: #{tpu_custom_call.1} parent=1 // pred_region
      %s72 = ssub.s32 512, 512
      %73 = vsyncadd [#allocation9], %s72
      %s74 = sshll.u32 [#allocation10], 4
      %s75 = int_to_ptr.vmem [resolvable:$true] %s74
      %80 = dma.hbm_to_vmem [thread:$0]  %s6, 512, %s75, [#allocation9], 128, 128, 8
    $region29: #{tpu_custom_call.1} parent=1 // pred_fallthru
      _
    // Predicated region
    $region30: #{tpu_custom_call.1} parent=1 // pred_check
      _
    $region31: #{tpu_custom_call.1} parent=1 // pred_check_branch
      %82 = sbr.rel (0) target = $region33
    $region32: #{tpu_custom_call.1} parent=1 // pred_region
      %s84 = ssub.s32 512, 512
      %85 = vsyncadd [#allocation12], %s84
      %s86 = sshll.u32 [#allocation11], 4
      %s87 = int_to_ptr.vmem [resolvable:$true] %s86
      %92 = dma.hbm_to_vmem [thread:$0]  %s7, 512, %s87, [#allocation12], 128, 128, 8
    $region33: #{tpu_custom_call.1} parent=1 // pred_fallthru
      _
    // Predicated region
    $region34: #{tpu_custom_call.1} parent=1 // pred_check
      _
    $region35: #{tpu_custom_call.1} parent=1 // pred_check_branch
      %94 = sbr.rel (0) target = $region37
    $region36: #{tpu_custom_call.1} parent=1 // pred_region
      _
    $region37: #{tpu_custom_call.1} parent=1 // pred_fallthru
      _
    // Predicated region
    $region38: #{tpu_custom_call.1} parent=1 // pred_check
      _
    $region39: #{tpu_custom_call.1} parent=1 // pred_check_branch
      %96 = sbr.rel (0) target = $region41
    $region40: #{tpu_custom_call.1} parent=1 // pred_region
      _
    $region41: #{tpu_custom_call.1} parent=1 // pred_fallthru
      _
    // Predicated region
    $region42: #{tpu_custom_call.1} parent=1 // pred_check
      _
    $region43: #{tpu_custom_call.1} parent=1 // pred_check_branch
      %98 = sbr.rel (0) target = $region45
    $region44: #{tpu_custom_call.1} parent=1 // pred_region
      _
    $region45: #{tpu_custom_call.1} parent=1 // pred_fallthru
      _
    // Predicated region
    $region46: #{tpu_custom_call.1} parent=1 // pred_check
      _
    $region47: #{tpu_custom_call.1} parent=1 // pred_check_branch
      %100 = sbr.rel (0) target = $region49
    $region48: #{tpu_custom_call.1} parent=1 // pred_region
      %101 = dma.done [#allocation3], 256
    $region49: #{tpu_custom_call.1} parent=1 // pred_fallthru
      _
    // Predicated region
    $region50: #{tpu_custom_call.1} parent=1 // pred_check
      _
    $region51: #{tpu_custom_call.1} parent=1 // pred_check_branch
      %103 = sbr.rel (0) target = $region53
    $region52: #{tpu_custom_call.1} parent=1 // pred_region
      %104 = dma.done [#allocation6], 32
    $region53: #{tpu_custom_call.1} parent=1 // pred_fallthru
      _
    // Predicated region
    $region54: #{tpu_custom_call.1} parent=1 // pred_check
      _
    $region55: #{tpu_custom_call.1} parent=1 // pred_check_branch
      %106 = sbr.rel (0) target = $region57
    $region56: #{tpu_custom_call.1} parent=1 // pred_region
      %107 = dma.done [#allocation6], 32
    $region57: #{tpu_custom_call.1} parent=1 // pred_fallthru
      _
    // Predicated region
    $region58: #{tpu_custom_call.1} parent=1 // pred_check
      _
    $region59: #{tpu_custom_call.1} parent=1 // pred_check_branch
      %109 = sbr.rel (0) target = $region61
    $region60: #{tpu_custom_call.1} parent=1 // pred_region
      %110 = dma.done [#allocation9], 512
    $region61: #{tpu_custom_call.1} parent=1 // pred_fallthru
      _
    // Predicated region
    $region62: #{tpu_custom_call.1} parent=1 // pred_check
      _
    $region63: #{tpu_custom_call.1} parent=1 // pred_check_branch
      %112 = sbr.rel (0) target = $region65
    $region64: #{tpu_custom_call.1} parent=1 // pred_region
      %113 = dma.done [#allocation9], 512
    $region65: #{tpu_custom_call.1} parent=1 // pred_fallthru
      _
    // Predicated region
    $region66: #{tpu_custom_call.1} parent=1 // pred_check
      _
    $region67: #{tpu_custom_call.1} parent=1 // pred_check_branch
      %115 = sbr.rel (0) target = $region69
    $region68: #{tpu_custom_call.1} parent=1 // pred_region
      %116 = dma.done [#allocation12], 512
    $region69: #{tpu_custom_call.1} parent=1 // pred_fallthru
      _
    %v117 = vld [vmem:[%s0] sm:$0xff]
    %v118 = vld [vmem:[%s0 + $0x8] sm:$0xff]
    %v119 = vld [vmem:[#allocation5] sm:$0x3]
    %v120 = vlaneseq
    %v121 = vshrl.u32 %v120, 7
    %v122 = vsub.s32 0, %v121
    %v123 = vrot.slane %v119, %v122
    %125 = vbcast.lane.b32.xlu0 %v123, 256
    %v126 = vpop.permute.xlu0 %125
    %v127 = vlaneseq
    %v128 = vshrl.u32 %v127, 7
    %v129 = vsub.s32 1, %v128
    %v130 = vrot.slane %v119, %v129
    %132 = vbcast.lane.b32.xlu0 %v130, 256
    %v133 = vpop.permute.xlu0 %132
    %v134 = vmul.f32 %v117, %v126
    %v135 = vmul.f32 %v118, %v133
    %vm136 = vcmask 261120
    %v137 = vsel %vm136, %v134, 0.0
    %v138 = vrot.slane %v137, 4
    %v139 = vadd.f32 %v137, %v138
    %v140 = vrot.slane %v139, 2
    %v141 = vadd.f32 %v139, %v140
    %v142 = vrot.slane %v141, 1
    %v143 = vadd.f32 %v141, %v142
    %v144 = vsel %vm136, %v135, 0.0
    %v145 = vrot.slane %v144, 4
    %v146 = vadd.f32 %v144, %v145
    %v147 = vrot.slane %v146, 2
    %v148 = vadd.f32 %v146, %v147
    %v149 = vrot.slane %v148, 1
    %v150 = vadd.f32 %v148, %v149
    %vm151 = vcmask 58368
    %v152 = vsel %vm151, %v119, 0.0
    %153 = vadd.xlane.f32.xlu0 %v152
    %v154 = vpop.xlane.xlu0 %153
    %v155 = vmax.f32 %v154, 1.0
    %v157 = vrot.slane %v155, 1
    %v160 = vrcp.pop %v155
    %v161 = vmul.f32 %v143, %v160
    %v162 = vrcp.pop %v157
    %v163 = vmul.f32 %v150, %v162
    %v164 = vld [vmem:[#allocation2] sm:$0xff]
    %v165 = vld [vmem:[#allocation2 + $0x8] sm:$0xff]
    %v166 = vld [vmem:[#allocation7] sm:$0x3]
    %v167 = vlaneseq
    %v168 = vshrl.u32 %v167, 7
    %v169 = vsub.s32 0, %v168
    %v170 = vrot.slane %v166, %v169
    %172 = vbcast.lane.b32.xlu0 %v170, 256
    %v173 = vpop.permute.xlu0 %172
    %v174 = vlaneseq
    %v175 = vshrl.u32 %v174, 7
    %v176 = vsub.s32 1, %v175
    %v177 = vrot.slane %v166, %v176
    %179 = vbcast.lane.b32.xlu0 %v177, 256
    %v180 = vpop.permute.xlu0 %179
    %v181 = vmul.f32 %v164, %v173
    %v182 = vmul.f32 %v165, %v180
    %v183 = vsel %vm136, %v181, 0.0
    %v184 = vrot.slane %v183, 4
    %v185 = vadd.f32 %v183, %v184
    %v186 = vrot.slane %v185, 2
    %v187 = vadd.f32 %v185, %v186
    %v188 = vrot.slane %v187, 1
    %v189 = vadd.f32 %v187, %v188
    %v190 = vsel %vm136, %v182, 0.0
    %v191 = vrot.slane %v190, 4
    %v192 = vadd.f32 %v190, %v191
    %v193 = vrot.slane %v192, 2
    %v194 = vadd.f32 %v192, %v193
    %v195 = vrot.slane %v194, 1
    %v196 = vadd.f32 %v194, %v195
    %v197 = vsel %vm151, %v166, 0.0
    %198 = vadd.xlane.f32.xlu0 %v197
    %v199 = vpop.xlane.xlu0 %198
    %v200 = vmax.f32 %v199, 1.0
    %v202 = vrot.slane %v200, 1
    %v205 = vrcp.pop %v200
    %v206 = vmul.f32 %v189, %v205
    %v207 = vrcp.pop %v202
    %v208 = vmul.f32 %v196, %v207
    %v209 = vsub.f32 %v161, %v206
    %v210 = vsub.f32 %v163, %v208
    %v211 = vand.u32 2147483647, %v209
    %v212 = vand.u32 2147483647, %v210
    %v213 = vmul.f32 %v161, %v206
    %v214 = vmul.f32 %v163, %v208
    %v215 = vld [vmem:[%s4] sm:$0xff]
    %v216 = vld [vmem:[%s4 + $0x8] sm:$0xff]
    %v217 = vld [vmem:[%s4 + $0x10] sm:$0xff]
    %v218 = vld [vmem:[%s4 + $0x18] sm:$0xff]
    %v219 = vld [vmem:[#allocation8] sm:$0xff]
    %v220 = vld [vmem:[#allocation8 + $0x8] sm:$0xff]
    %v221 = vld [vmem:[#allocation8 + $0x10] sm:$0xff]
    %v222 = vld [vmem:[#allocation8 + $0x18] sm:$0xff]
    %v225 = vrot.slane %v208, 7
    %vm226 = vcmask 1041409
    %v227 = vsel %vm226, %v225, %v206
    %v228 = vsel %vm136, %v227, 0
    %230 = vmatprep.subr.mxu0 0.0
    %231 = vmatpush1.msra.mxu0 %v219
    %232 = vmatprep.subr.mxu0 0.0
    %233 = vmatpush1.msra.mxu0 %v220
    %234 = vmatprep.subr.mxu0 0.0
    %235 = vmatpush1.msra.mxu0 %v221
    %236 = vmatprep.subr.mxu0 0.0
    %237 = vmatpush1.msra.mxu0 %v222
    %238 = vmatprep.subr.mxu0 0.0
    %239 = vmatpush1.msra.mxu0 0.0
    %240 = vmatprep.subr.mxu0 0.0
    %241 = vmatpush1.msra.mxu0 0.0
    %242 = vmatprep.subr.mxu0 0.0
    %243 = vmatpush1.msra.mxu0 0.0
    %244 = vmatprep.subr.mxu0 0.0
    %245 = vmatpush1.msra.mxu0 0.0
    %246 = vmatprep.subr.mxu0 0.0
    %247 = vmatpush1.msra.mxu0 0.0
    %248 = vmatprep.subr.mxu0 0.0
    %249 = vmatpush1.msra.mxu0 0.0
    %250 = vmatprep.subr.mxu0 0.0
    %251 = vmatpush1.msra.mxu0 0.0
    %252 = vmatprep.subr.mxu0 0.0
    %253 = vmatpush1.msra.mxu0 0.0
    %254 = vmatprep.subr.mxu0 0.0
    %255 = vmatpush1.msra.mxu0 0.0
    %256 = vmatprep.subr.mxu0 0.0
    %257 = vmatpush1.msra.mxu0 0.0
    %258 = vmatprep.subr.mxu0 0.0
    %259 = vmatpush1.msra.mxu0 0.0
    %260 = vmatprep.subr.mxu0 0.0
    %261 = vmatpush1.msra.mxu0 0.0
    %262 = vmatprep.subr.mxu0 0.0
    %263 = vmatpush1.msra.mxu0 0.0
    %264 = vmatprep.subr.mxu0 0.0
    %265 = vmatpush1.msra.mxu0 0.0
    %266 = vmatprep.subr.mxu0 0.0
    %267 = vmatpush1.msra.mxu0 0.0
    %268 = vmatprep.subr.mxu0 0.0
    %269 = vmatpush1.msra.mxu0 0.0
    %270 = vmatprep.subr.mxu0 0.0
    %271 = vmatpush1.msra.mxu0 0.0
    %272 = vmatprep.subr.mxu0 0.0
    %273 = vmatpush1.msra.mxu0 0.0
    %274 = vmatprep.subr.mxu0 0.0
    %275 = vmatpush1.msra.mxu0 0.0
    %276 = vmatprep.subr.mxu0 0.0
    %277 = vmatpush1.msra.mxu0 0.0
    %278 = vmatprep.subr.mxu0 0.0
    %279 = vmatpush1.msra.mxu0 0.0
    %280 = vmatprep.subr.mxu0 0.0
    %281 = vmatpush1.msra.mxu0 0.0
    %282 = vmatprep.subr.mxu0 0.0
    %283 = vmatpush1.msra.mxu0 0.0
    %284 = vmatprep.subr.mxu0 0.0
    %285 = vmatpush1.msra.mxu0 0.0
    %286 = vmatprep.subr.mxu0 0.0
    %287 = vmatpush1.msra.mxu0 0.0
    %288 = vmatprep.subr.mxu0 0.0
    %289 = vmatpush1.msra.mxu0 0.0
    %290 = vmatprep.subr.mxu0 0.0
    %291 = vmatpush1.msra.mxu0 0.0
    %292 = vmatprep.subr.mxu0 0.0
    %293 = vmatpush1.msra.mxu0 0.0
    %294 = vmatprep.mubr.f32.mxu0 0.0
    %295 = vmatmul.mubr.f32.gmra.mrb[0].mxu0 %v228
    %v296 = vpop.f32.mrb[0].mxu0
    %v297 = vadd.f32 0.0, %v296
    %v298 = vpop.f32.mrb[0].mxu0
    %299 = vdwg.mxu0
    %v302 = vrot.slane %v163, 7
    %v303 = vsel %vm226, %v302, %v161
    %v304 = vsel %vm136, %v303, 0
    %306 = vmatprep.subr.mxu0 0.0
    %307 = vmatpush1.msra.mxu0 %v215
    %308 = vmatprep.subr.mxu0 0.0
    %309 = vmatpush1.msra.mxu0 %v216
    %310 = vmatprep.subr.mxu0 0.0
    %311 = vmatpush1.msra.mxu0 %v217
    %312 = vmatprep.subr.mxu0 0.0
    %313 = vmatpush1.msra.mxu0 %v218
    %314 = vmatprep.subr.mxu0 0.0
    %315 = vmatpush1.msra.mxu0 0.0
    %316 = vmatprep.subr.mxu0 0.0
    %317 = vmatpush1.msra.mxu0 0.0
    %318 = vmatprep.subr.mxu0 0.0
    %319 = vmatpush1.msra.mxu0 0.0
    %320 = vmatprep.subr.mxu0 0.0
    %321 = vmatpush1.msra.mxu0 0.0
    %322 = vmatprep.subr.mxu0 0.0
    %323 = vmatpush1.msra.mxu0 0.0
    %324 = vmatprep.subr.mxu0 0.0
    %325 = vmatpush1.msra.mxu0 0.0
    %326 = vmatprep.subr.mxu0 0.0
    %327 = vmatpush1.msra.mxu0 0.0
    %328 = vmatprep.subr.mxu0 0.0
    %329 = vmatpush1.msra.mxu0 0.0
    %330 = vmatprep.subr.mxu0 0.0
    %331 = vmatpush1.msra.mxu0 0.0
    %332 = vmatprep.subr.mxu0 0.0
    %333 = vmatpush1.msra.mxu0 0.0
    %334 = vmatprep.subr.mxu0 0.0
    %335 = vmatpush1.msra.mxu0 0.0
    %336 = vmatprep.subr.mxu0 0.0
    %337 = vmatpush1.msra.mxu0 0.0
    %338 = vmatprep.subr.mxu0 0.0
    %339 = vmatpush1.msra.mxu0 0.0
    %340 = vmatprep.subr.mxu0 0.0
    %341 = vmatpush1.msra.mxu0 0.0
    %342 = vmatprep.subr.mxu0 0.0
    %343 = vmatpush1.msra.mxu0 0.0
    %344 = vmatprep.subr.mxu0 0.0
    %345 = vmatpush1.msra.mxu0 0.0
    %346 = vmatprep.subr.mxu0 0.0
    %347 = vmatpush1.msra.mxu0 0.0
    %348 = vmatprep.subr.mxu0 0.0
    %349 = vmatpush1.msra.mxu0 0.0
    %350 = vmatprep.subr.mxu0 0.0
    %351 = vmatpush1.msra.mxu0 0.0
    %352 = vmatprep.subr.mxu0 0.0
    %353 = vmatpush1.msra.mxu0 0.0
    %354 = vmatprep.subr.mxu0 0.0
    %355 = vmatpush1.msra.mxu0 0.0
    %356 = vmatprep.subr.mxu0 0.0
    %357 = vmatpush1.msra.mxu0 0.0
    %358 = vmatprep.subr.mxu0 0.0
    %359 = vmatpush1.msra.mxu0 0.0
    %360 = vmatprep.subr.mxu0 0.0
    %361 = vmatpush1.msra.mxu0 0.0
    %362 = vmatprep.subr.mxu0 0.0
    %363 = vmatpush1.msra.mxu0 0.0
    %364 = vmatprep.subr.mxu0 0.0
    %365 = vmatpush1.msra.mxu0 0.0
    %366 = vmatprep.subr.mxu0 0.0
    %367 = vmatpush1.msra.mxu0 0.0
    %368 = vmatprep.subr.mxu0 0.0
    %369 = vmatpush1.msra.mxu0 0.0
    %370 = vmatprep.mubr.f32.mxu0 0.0
    %371 = vmatmul.mubr.f32.gmra.mrb[0].mxu0 %v304
    %v372 = vpop.f32.mrb[0].mxu0
    %v373 = vadd.f32 %v297, %v372
    %v374 = vpop.f32.mrb[0].mxu0
    %375 = vdwg.mxu0
    %v376 = vld [vmem:[#allocation10] sm:$0xff]
    %v377 = vld [vmem:[#allocation10 + $0x8] sm:$0xff]
    %v378 = vld [vmem:[#allocation10 + $0x10] sm:$0xff]
    %v379 = vld [vmem:[#allocation10 + $0x18] sm:$0xff]
    %v382 = vrot.slane %v212, 7
    %v383 = vsel %vm226, %v382, %v211
    %v384 = vsel %vm136, %v383, 0
    %386 = vmatprep.subr.mxu0 0.0
    %387 = vmatpush1.msra.mxu0 %v376
    %388 = vmatprep.subr.mxu0 0.0
    %389 = vmatpush1.msra.mxu0 %v377
    %390 = vmatprep.subr.mxu0 0.0
    %391 = vmatpush1.msra.mxu0 %v378
    %392 = vmatprep.subr.mxu0 0.0
    %393 = vmatpush1.msra.mxu0 %v379
    %394 = vmatprep.subr.mxu0 0.0
    %395 = vmatpush1.msra.mxu0 0.0
    %396 = vmatprep.subr.mxu0 0.0
    %397 = vmatpush1.msra.mxu0 0.0
    %398 = vmatprep.subr.mxu0 0.0
    %399 = vmatpush1.msra.mxu0 0.0
    %400 = vmatprep.subr.mxu0 0.0
    %401 = vmatpush1.msra.mxu0 0.0
    %402 = vmatprep.subr.mxu0 0.0
    %403 = vmatpush1.msra.mxu0 0.0
    %404 = vmatprep.subr.mxu0 0.0
    %405 = vmatpush1.msra.mxu0 0.0
    %406 = vmatprep.subr.mxu0 0.0
    %407 = vmatpush1.msra.mxu0 0.0
    %408 = vmatprep.subr.mxu0 0.0
    %409 = vmatpush1.msra.mxu0 0.0
    %410 = vmatprep.subr.mxu0 0.0
    %411 = vmatpush1.msra.mxu0 0.0
    %412 = vmatprep.subr.mxu0 0.0
    %413 = vmatpush1.msra.mxu0 0.0
    %414 = vmatprep.subr.mxu0 0.0
    %415 = vmatpush1.msra.mxu0 0.0
    %416 = vmatprep.subr.mxu0 0.0
    %417 = vmatpush1.msra.mxu0 0.0
    %418 = vmatprep.subr.mxu0 0.0
    %419 = vmatpush1.msra.mxu0 0.0
    %420 = vmatprep.subr.mxu0 0.0
    %421 = vmatpush1.msra.mxu0 0.0
    %422 = vmatprep.subr.mxu0 0.0
    %423 = vmatpush1.msra.mxu0 0.0
    %424 = vmatprep.subr.mxu0 0.0
    %425 = vmatpush1.msra.mxu0 0.0
    %426 = vmatprep.subr.mxu0 0.0
    %427 = vmatpush1.msra.mxu0 0.0
    %428 = vmatprep.subr.mxu0 0.0
    %429 = vmatpush1.msra.mxu0 0.0
    %430 = vmatprep.subr.mxu0 0.0
    %431 = vmatpush1.msra.mxu0 0.0
    %432 = vmatprep.subr.mxu0 0.0
    %433 = vmatpush1.msra.mxu0 0.0
    %434 = vmatprep.subr.mxu0 0.0
    %435 = vmatpush1.msra.mxu0 0.0
    %436 = vmatprep.subr.mxu0 0.0
    %437 = vmatpush1.msra.mxu0 0.0
    %438 = vmatprep.subr.mxu0 0.0
    %439 = vmatpush1.msra.mxu0 0.0
    %440 = vmatprep.subr.mxu0 0.0
    %441 = vmatpush1.msra.mxu0 0.0
    %442 = vmatprep.subr.mxu0 0.0
    %443 = vmatpush1.msra.mxu0 0.0
    %444 = vmatprep.subr.mxu0 0.0
    %445 = vmatpush1.msra.mxu0 0.0
    %446 = vmatprep.subr.mxu0 0.0
    %447 = vmatpush1.msra.mxu0 0.0
    %448 = vmatprep.subr.mxu0 0.0
    %449 = vmatpush1.msra.mxu0 0.0
    %450 = vmatprep.mubr.f32.mxu0 0.0
    %451 = vmatmul.mubr.f32.gmra.mrb[0].mxu0 %v384
    %v452 = vpop.f32.mrb[0].mxu0
    %v453 = vadd.f32 0.0, %v452
    %v454 = vpop.f32.mrb[0].mxu0
    %455 = vdwg.mxu0
    %v456 = vadd.f32 %v373, %v453
    %v457 = vld [vmem:[#allocation11] sm:$0xff]
    %v458 = vld [vmem:[#allocation11 + $0x8] sm:$0xff]
    %v459 = vld [vmem:[#allocation11 + $0x10] sm:$0xff]
    %v460 = vld [vmem:[#allocation11 + $0x18] sm:$0xff]
    %v463 = vrot.slane %v214, 7
    %v464 = vsel %vm226, %v463, %v213
    %v465 = vsel %vm136, %v464, 0
    %467 = vmatprep.subr.mxu0 0.0
    %468 = vmatpush1.msra.mxu0 %v457
    %469 = vmatprep.subr.mxu0 0.0
    %470 = vmatpush1.msra.mxu0 %v458
    %471 = vmatprep.subr.mxu0 0.0
    %472 = vmatpush1.msra.mxu0 %v459
    %473 = vmatprep.subr.mxu0 0.0
    %474 = vmatpush1.msra.mxu0 %v460
    %475 = vmatprep.subr.mxu0 0.0
    %476 = vmatpush1.msra.mxu0 0.0
    %477 = vmatprep.subr.mxu0 0.0
    %478 = vmatpush1.msra.mxu0 0.0
    %479 = vmatprep.subr.mxu0 0.0
    %480 = vmatpush1.msra.mxu0 0.0
    %481 = vmatprep.subr.mxu0 0.0
    %482 = vmatpush1.msra.mxu0 0.0
    %483 = vmatprep.subr.mxu0 0.0
    %484 = vmatpush1.msra.mxu0 0.0
    %485 = vmatprep.subr.mxu0 0.0
    %486 = vmatpush1.msra.mxu0 0.0
    %487 = vmatprep.subr.mxu0 0.0
    %488 = vmatpush1.msra.mxu0 0.0
    %489 = vmatprep.subr.mxu0 0.0
    %490 = vmatpush1.msra.mxu0 0.0
    %491 = vmatprep.subr.mxu0 0.0
    %492 = vmatpush1.msra.mxu0 0.0
    %493 = vmatprep.subr.mxu0 0.0
    %494 = vmatpush1.msra.mxu0 0.0
    %495 = vmatprep.subr.mxu0 0.0
    %496 = vmatpush1.msra.mxu0 0.0
    %497 = vmatprep.subr.mxu0 0.0
    %498 = vmatpush1.msra.mxu0 0.0
    %499 = vmatprep.subr.mxu0 0.0
    %500 = vmatpush1.msra.mxu0 0.0
    %501 = vmatprep.subr.mxu0 0.0
    %502 = vmatpush1.msra.mxu0 0.0
    %503 = vmatprep.subr.mxu0 0.0
    %504 = vmatpush1.msra.mxu0 0.0
    %505 = vmatprep.subr.mxu0 0.0
    %506 = vmatpush1.msra.mxu0 0.0
    %507 = vmatprep.subr.mxu0 0.0
    %508 = vmatpush1.msra.mxu0 0.0
    %509 = vmatprep.subr.mxu0 0.0
    %510 = vmatpush1.msra.mxu0 0.0
    %511 = vmatprep.subr.mxu0 0.0
    %512 = vmatpush1.msra.mxu0 0.0
    %513 = vmatprep.subr.mxu0 0.0
    %514 = vmatpush1.msra.mxu0 0.0
    %515 = vmatprep.subr.mxu0 0.0
    %516 = vmatpush1.msra.mxu0 0.0
    %517 = vmatprep.subr.mxu0 0.0
    %518 = vmatpush1.msra.mxu0 0.0
    %519 = vmatprep.subr.mxu0 0.0
    %520 = vmatpush1.msra.mxu0 0.0
    %521 = vmatprep.subr.mxu0 0.0
    %522 = vmatpush1.msra.mxu0 0.0
    %523 = vmatprep.subr.mxu0 0.0
    %524 = vmatpush1.msra.mxu0 0.0
    %525 = vmatprep.subr.mxu0 0.0
    %526 = vmatpush1.msra.mxu0 0.0
    %527 = vmatprep.subr.mxu0 0.0
    %528 = vmatpush1.msra.mxu0 0.0
    %529 = vmatprep.subr.mxu0 0.0
    %530 = vmatpush1.msra.mxu0 0.0
    %531 = vmatprep.mubr.f32.mxu0 0.0
    %532 = vmatmul.mubr.f32.gmra.mrb[0].mxu0 %v465
    %v533 = vpop.f32.mrb[0].mxu0
    %v534 = vadd.f32 0.0, %v533
    %v535 = vpop.f32.mrb[0].mxu0
    %536 = vdwg.mxu0
    %v537 = vadd.f32 %v456, %v534
    %v538 = vld [vmem:[%s8] sm:$0x1]
    %v540 = vlaneseq
    %v541 = vshrl.u32 %v540, 7
    %v542 = vsub.s32 0, %v541
    %v543 = vrot.slane %v538, %v542
    %v545 = vadd.f32 %v537, %v543
    %v546 = vtanh.pop %v545
    %v547 = vld [vmem:[%s9] sm:$0xff]
    %v548 = vld [vmem:[%s9 + $0x8] sm:$0xff]
    %v549 = vld [vmem:[%s9 + $0x10] sm:$0xff]
    %v550 = vld [vmem:[%s9 + $0x18] sm:$0xff]
    %v551 = vld [vmem:[%s10] sm:$0x1]
    %v553 = vlaneseq
    %v554 = vshrl.u32 %v553, 7
    %v555 = vsub.s32 0, %v554
    %v556 = vrot.slane %v551, %v555
    %v559 = vsel %vm136, %v546, 0
    %561 = vmatprep.subr.mxu0 0.0
    %562 = vmatpush1.msra.mxu0 %v547
    %563 = vmatprep.subr.mxu0 0.0
    %564 = vmatpush1.msra.mxu0 %v548
    %565 = vmatprep.subr.mxu0 0.0
    %566 = vmatpush1.msra.mxu0 %v549
    %567 = vmatprep.subr.mxu0 0.0
    %568 = vmatpush1.msra.mxu0 %v550
    %569 = vmatprep.subr.mxu0 0.0
    %570 = vmatpush1.msra.mxu0 0.0
    %571 = vmatprep.subr.mxu0 0.0
    %572 = vmatpush1.msra.mxu0 0.0
    %573 = vmatprep.subr.mxu0 0.0
    %574 = vmatpush1.msra.mxu0 0.0
    %575 = vmatprep.subr.mxu0 0.0
    %576 = vmatpush1.msra.mxu0 0.0
    %577 = vmatprep.subr.mxu0 0.0
    %578 = vmatpush1.msra.mxu0 0.0
    %579 = vmatprep.subr.mxu0 0.0
    %580 = vmatpush1.msra.mxu0 0.0
    %581 = vmatprep.subr.mxu0 0.0
    %582 = vmatpush1.msra.mxu0 0.0
    %583 = vmatprep.subr.mxu0 0.0
    %584 = vmatpush1.msra.mxu0 0.0
    %585 = vmatprep.subr.mxu0 0.0
    %586 = vmatpush1.msra.mxu0 0.0
    %587 = vmatprep.subr.mxu0 0.0
    %588 = vmatpush1.msra.mxu0 0.0
    %589 = vmatprep.subr.mxu0 0.0
    %590 = vmatpush1.msra.mxu0 0.0
    %591 = vmatprep.subr.mxu0 0.0
    %592 = vmatpush1.msra.mxu0 0.0
    %593 = vmatprep.subr.mxu0 0.0
    %594 = vmatpush1.msra.mxu0 0.0
    %595 = vmatprep.subr.mxu0 0.0
    %596 = vmatpush1.msra.mxu0 0.0
    %597 = vmatprep.subr.mxu0 0.0
    %598 = vmatpush1.msra.mxu0 0.0
    %599 = vmatprep.subr.mxu0 0.0
    %600 = vmatpush1.msra.mxu0 0.0
    %601 = vmatprep.subr.mxu0 0.0
    %602 = vmatpush1.msra.mxu0 0.0
    %603 = vmatprep.subr.mxu0 0.0
    %604 = vmatpush1.msra.mxu0 0.0
    %605 = vmatprep.subr.mxu0 0.0
    %606 = vmatpush1.msra.mxu0 0.0
    %607 = vmatprep.subr.mxu0 0.0
    %608 = vmatpush1.msra.mxu0 0.0
    %609 = vmatprep.subr.mxu0 0.0
    %610 = vmatpush1.msra.mxu0 0.0
    %611 = vmatprep.subr.mxu0 0.0
    %612 = vmatpush1.msra.mxu0 0.0
    %613 = vmatprep.subr.mxu0 0.0
    %614 = vmatpush1.msra.mxu0 0.0
    %615 = vmatprep.subr.mxu0 0.0
    %616 = vmatpush1.msra.mxu0 0.0
    %617 = vmatprep.subr.mxu0 0.0
    %618 = vmatpush1.msra.mxu0 0.0
    %619 = vmatprep.subr.mxu0 0.0
    %620 = vmatpush1.msra.mxu0 0.0
    %621 = vmatprep.subr.mxu0 0.0
    %622 = vmatpush1.msra.mxu0 0.0
    %623 = vmatprep.subr.mxu0 0.0
    %624 = vmatpush1.msra.mxu0 0.0
    %625 = vmatprep.mubr.f32.mxu0 0.0
    %626 = vmatmul.mubr.f32.gmra.mrb[0].mxu0 %v559
    %v627 = vpop.f32.mrb[0].mxu0
    %v628 = vadd.f32 %v556, %v627
    %v629 = vpop.f32.mrb[0].mxu0
    %630 = vdwg.mxu0
    %vm631 = vcmask 9216
    %632 = vst.msk [vmem:[#allocation13] sm:$0x3] %vm631, %v628
    // Predicated region
    $region70: #{tpu_custom_call.1} parent=1 // pred_check
      _
    $region71: #{tpu_custom_call.1} parent=1 // pred_check_branch
      %634 = sbr.rel (0) target = $region73
    $region72: #{tpu_custom_call.1} parent=1 // pred_region
      %s636 = ssub.s32 32, 32
      %637 = vsyncadd [#allocation4], %s636
      %s639 = sshll.u32 [#allocation13], 4
      %s640 = int_to_ptr.vmem [resolvable:$true] %s639
      %642 = dma.vmem_to_hbm [thread:$0]  %s640, 32, %s11, [#allocation4]
    $region73: #{tpu_custom_call.1} parent=1 // pred_fallthru
      _
    // Predicated region
    $region74: #{tpu_custom_call.1} parent=1 // pred_check
      _
    $region75: #{tpu_custom_call.1} parent=1 // pred_check_branch
      %644 = sbr.rel (0) target = $region77
    $region76: #{tpu_custom_call.1} parent=1 // pred_region
      %645 = dma.done [#allocation4], 32
    $region77: #{tpu_custom_call.1} parent=1 // pred_fallthru
      _
    %646 = vsyncpa [#allocation3], 1
    %647 = vsyncpa [#allocation6], 1
    %648 = vsyncpa [#allocation9], 1
    %649 = vsyncpa [#allocation12], 1
    %650 = vsyncpa [#allocation4], 1

</llo_original>
